<compile_context>
chip_gen: v7x
topology: tpu7x:2x2x1
jax: 0.10.0
libtpu: 0.0.40
codegen_flags: <defaults>
</compile_context>

<pallas_src>
import functools

import jax
import jax.numpy as jnp
from jax.experimental import pallas as pl
from jax.experimental.pallas import tpu as pltpu


def _gauss_parabola_lrelu_kernel(sa_ref, x_ref, o_ref, *, negative_slope, epi,
                                 use_max_form):
    # sa_ref: (1, lanes) param tile (same block for every grid step)
    # x_ref / o_ref: (tm, lanes) tiles
    sa = sa_ref[...]                          # (1, lanes) float32
    a = sa * sa + jnp.float32(epi)            # per-feature coefficient
    x = x_ref[...].astype(jnp.float32)        # (tm, lanes)
    y = jnp.float32(1.0) - a * x * x          # broadcast (1, lanes) over rows
    ns = jnp.float32(negative_slope)
    if use_max_form:
        out = jnp.maximum(y, ns * y)          # leaky_relu for 0 < ns <= 1
    else:
        out = jnp.where(y >= 0, y, ns * y)    # general negative_slope
    o_ref[...] = out.astype(o_ref.dtype)


def _vmem_capacity_bytes():
    try:
        return int(pltpu.get_tpu_info().vmem_capacity_bytes)
    except Exception:
        return 64 << 20  # most conservative (v7x per-TC VMEM)


def _sublane_multiple(itemsize):
    # Sub-32-bit dtypes pack along sublanes: 8 rows f32, 16 bf16, 32 int8/fp8.
    return {4: 8, 2: 16, 1: 32}.get(itemsize, 8)


def _choose_fold(n_rows, size, *, max_lane_elems=4096):
    """Fold k rows into the lane dim for lane-dense stores when `size` is
    narrow or not 128-aligned. k must divide n_rows exactly (pure reshape)."""
    if size >= max_lane_elems or n_rows <= 1:
        return 1
    if size % 128 == 0 and size >= 1024:
        return 1  # already lane-dense enough
    k_cap = min(n_rows, max(1, max_lane_elems // size))
    for k in range(k_cap, 1, -1):
        if n_rows % k == 0:
            return k
    return 1


def _choose_tm(n_rows_f, lane_elems, itemsize, *, target_tile_bytes):
    """Row tile: as large as the generation-aware tile budget allows, rounded
    to the dtype's sublane multiple. Caller uses the full array when tm would
    cover it (single grid step)."""
    sub = _sublane_multiple(itemsize)
    bytes_per_row = max(1, lane_elems * itemsize)
    tm = max(sub, target_tile_bytes // bytes_per_row)
    tm = (tm // sub) * sub
    return max(sub, tm)


def gaussian_like_activation_parabola_leaky_relu(
    x, sqrt_of_a, *, negative_slope=0.01, epi=1e-8, tm=None
):
    """x: (..., size) float, sqrt_of_a: (size,) float32."""
    assert negative_slope > 0
    assert epi > 0
    size = sqrt_of_a.shape[0]
    assert x.shape[-1] == size, "trailing dim of x must match parameter size"

    orig_shape = x.shape
    x2d = x.reshape(-1, size)
    n_rows = x2d.shape[0]
    itemsize = jnp.dtype(x2d.dtype).itemsize

    # --- lane-dense folding: widen the lane dimension when size is narrow ---
    k = _choose_fold(n_rows, size)
    lane_elems = k * size
    n_rows_f = n_rows // k
    x2d = x2d.reshape(n_rows_f, lane_elems)
    sa_row = sqrt_of_a.astype(jnp.float32)
    if k > 1:
        sa_row = jnp.tile(sa_row, k)
    sa2d = sa_row.reshape(1, lane_elems)

    # --- generation-aware tile budget ---
    vmem_cap = _vmem_capacity_bytes()
    target_tile_bytes = max(2 << 20, min(8 << 20, vmem_cap // 16))
    if tm is None:
        tm = _choose_tm(n_rows_f, lane_elems, itemsize,
                        target_tile_bytes=target_tile_bytes)

    if tm >= n_rows_f:
        # Single grid step: block = full array (avoids pointless extra steps
        # on 1-TC chips and satisfies the (8,128) rule via full-dim blocks).
        tm = n_rows_f
        grid = (1,)
    else:
        grid = (pl.cdiv(n_rows_f, tm),)

    kernel = functools.partial(
        _gauss_parabola_lrelu_kernel,
        negative_slope=negative_slope,
        epi=epi,
        use_max_form=(0.0 < negative_slope <= 1.0),
    )

    # Double-buffered x + out tiles, plus the small param row, plus margin.
    tile_bytes = tm * lane_elems * itemsize
    footprint = 2 * 2 * tile_bytes + 2 * lane_elems * 4 + (2 << 20)
    cp_kwargs = dict(dimension_semantics=("parallel",))
    if footprint > (16 << 20):  # above the most conservative default scoped limit
        cp_kwargs["vmem_limit_bytes"] = min(footprint, int(vmem_cap * 0.75))

    out2d = pl.pallas_call(
        kernel,
        out_shape=jax.ShapeDtypeStruct((n_rows_f, lane_elems), x2d.dtype),
        grid_spec=pltpu.PrefetchScalarGridSpec(
            num_scalar_prefetch=0,
            grid=grid,
            in_specs=[
                pl.BlockSpec((1, lane_elems), lambda i: (0, 0)),    # param, reused
                pl.BlockSpec((tm, lane_elems), lambda i: (i, 0)),   # x tile
            ],
            out_specs=pl.BlockSpec((tm, lane_elems), lambda i: (i, 0)),
        ),
        compiler_params=pltpu.CompilerParams(**cp_kwargs),
    )(sa2d, x2d)

    return out2d.reshape(orig_shape)


def reference(x, sqrt_of_a, *, negative_slope=0.01, epi=1e-8):
    # NOTE: epi=1e-8 added in float32 to O(1) coefficients is below f32 eps,
    # matching a float32 PyTorch reference (differs from a float64 reference).
    a = sqrt_of_a * sqrt_of_a + epi
    y = -a * x * x + 1.0
    return jnp.where(y >= 0, y, negative_slope * y)


if __name__ == "__main__":
    # Module construction: size=128, a=-1.0 -> sqrt_of_a = sqrt(-a) = 1.0
    size = 128
    a_init = -1.0
    negative_slope = 0.01
    epi = 1e-8

    # Deterministic parameter init (matches torch.full((size,), sqrt(-a)))
    sqrt_of_a = jnp.full((size,), jnp.sqrt(-a_init), dtype=jnp.float32)

    key = jax.random.PRNGKey(0)

    # 4-D input (2, 3, 16, 128): 96 rows -> exercises the lane-folding path
    # (rows folded into a wide lane dimension) plus the reshape round trip.
    x_main = jax.random.normal(key, (2, 3, 16, size), dtype=jnp.float32) * 2.0
    out_main = gaussian_like_activation_parabola_leaky_relu(
        x_main, sqrt_of_a, negative_slope=negative_slope, epi=epi
    )
    out_main = jax.block_until_ready(out_main)
    ref_main = reference(x_main, sqrt_of_a, negative_slope=negative_slope, epi=epi)
    assert out_main.shape == x_main.shape and out_main.dtype == x_main.dtype
    assert jnp.allclose(out_main, ref_main, atol=1e-6, rtol=1e-6), "mismatch (main)"

    # Prime row count (37): no fold divides it -> exercises the unfolded /
    # narrow-lane path with a single full-array block.
    x_odd = jax.random.normal(jax.random.fold_in(key, 1), (37, size),
                              dtype=jnp.float32) * 2.0
    out_odd = gaussian_like_activation_parabola_leaky_relu(
        x_odd, sqrt_of_a, negative_slope=negative_slope, epi=epi
    )
    out_odd = jax.block_until_ready(out_odd)
    ref_odd = reference(x_odd, sqrt_of_a, negative_slope=negative_slope, epi=epi)
    assert jnp.allclose(out_odd, ref_odd, atol=1e-6, rtol=1e-6), "mismatch (odd N)"

    # bf16 input: exercises the 16-row sublane rounding path.
    x_bf16 = (jax.random.normal(jax.random.fold_in(key, 2), (64, size),
                                dtype=jnp.float32) * 2.0).astype(jnp.bfloat16)
    out_bf16 = gaussian_like_activation_parabola_leaky_relu(
        x_bf16, sqrt_of_a, negative_slope=negative_slope, epi=epi
    )
    out_bf16 = jax.block_until_ready(out_bf16)
    ref_bf16 = reference(x_bf16.astype(jnp.float32), sqrt_of_a,
                         negative_slope=negative_slope, epi=epi).astype(jnp.bfloat16)
    assert jnp.allclose(out_bf16.astype(jnp.float32),
                        ref_bf16.astype(jnp.float32), atol=2e-2, rtol=2e-2), \
        "mismatch (bf16)"

    print("KERNEL_OK")
</pallas_src>

<mosaic_0001>
module attributes {stable_mosaic.version = 11 : i64} {
  func.func @_gauss_parabola_lrelu_kernel(%arg0: i32, %arg1: memref<1x4096xf32, #tpu.memory_space<vmem>>, %arg2: memref<3x4096xf32, #tpu.memory_space<vmem>>, %arg3: memref<3x4096xf32, #tpu.memory_space<vmem>>) attributes {dimension_semantics = [#tpu.dimension_semantics<parallel>], iteration_bounds = array<i64: 1>, scalar_prefetch = 0 : i64, scratch_operands = 0 : i64, tpu.core_type = #tpu.core_type<tc>, window_params = [{pipeline_mode = #tpu.pipeline_mode<synchronous>, transform_indices = @transform_0, window_bounds = array<i64: 1, 4096>}, {transform_indices = @transform_1, window_bounds = array<i64: 3, 4096>}, {transform_indices = @transform_2, window_bounds = array<i64: 3, 4096>}]} {
    %c0 = arith.constant 0 : index
    %c0_0 = arith.constant 0 : index
    %0 = vector.load %arg1[%c0, %c0_0] : memref<1x4096xf32, #tpu.memory_space<vmem>>, vector<1x4096xf32>
    %1 = arith.mulf %0, %0 : vector<1x4096xf32>
    %cst = arith.constant 9.99999993E-9 : f32
    %2 = vector.broadcast %cst : f32 to vector<1x4096xf32>
    %3 = arith.addf %1, %2 : vector<1x4096xf32>
    %c0_1 = arith.constant 0 : index
    %c0_2 = arith.constant 0 : index
    %4 = vector.load %arg2[%c0_1, %c0_2] : memref<3x4096xf32, #tpu.memory_space<vmem>>, vector<3x4096xf32>
    %5 = vector.broadcast %3 : vector<1x4096xf32> to vector<3x4096xf32>
    %6 = arith.mulf %5, %4 : vector<3x4096xf32>
    %7 = arith.mulf %6, %4 : vector<3x4096xf32>
    %cst_3 = arith.constant 1.000000e+00 : f32
    %8 = vector.broadcast %cst_3 : f32 to vector<3x4096xf32>
    %9 = arith.subf %8, %7 : vector<3x4096xf32>
    %cst_4 = arith.constant 0.00999999977 : f32
    %10 = vector.broadcast %cst_4 : f32 to vector<3x4096xf32>
    %11 = arith.mulf %10, %9 : vector<3x4096xf32>
    %12 = arith.maximumf %9, %11 : vector<3x4096xf32>
    %c0_5 = arith.constant 0 : index
    %c0_6 = arith.constant 0 : index
    %13 = vector.load %arg3[%c0_5, %c0_6] : memref<3x4096xf32, #tpu.memory_space<vmem>>, vector<3x4096xf32>
    tpu.vector_store %arg3[%c0_5, %c0_6], %12 {strides = array<i32>} : memref<3x4096xf32, #tpu.memory_space<vmem>>, vector<3x4096xf32>,
    return
  }
  func.func @transform_0(%arg0: i32) -> (i32, i32) {
    %c0_i32 = arith.constant 0 : i32
    %c0_i32_0 = arith.constant 0 : i32
    %c0_i32_1 = arith.constant 0 : i32
    return %c0_i32, %c0_i32_0 : i32, i32
  }
  func.func @transform_1(%arg0: i32) -> (i32, i32) {
    %c0_i32 = arith.constant 0 : i32
    %c0_i32_0 = arith.constant 0 : i32
    return %arg0, %c0_i32 : i32, i32
  }
  func.func @transform_2(%arg0: i32) -> (i32, i32) {
    %c0_i32 = arith.constant 0 : i32
    %c0_i32_0 = arith.constant 0 : i32
    return %arg0, %c0_i32 : i32, i32
  }
}

</mosaic_0001>

<llo_original>
// kernel: tpu_custom_call.1
$region0: #{tpu_custom_call.1}
  #allocation0 [shape = 'u32[]', space=smem, size = 0x4, offset = 0x4, fixed_abs, tag = 'smem constant byte address 0x4 - core index']
  #allocation1 [shape = 'u32[144,128]{1,0:T(1,128)}', space=vmem, size = 0x12000, scoped, tag = 'internal scratch']
  %s0 = inlined_call_operand.hbm [shape: f32[1,4096], index: 0, kind: input, shape index: {}]
  %s1 = inlined_call_operand.hbm [shape: f32[3,4096], index: 1, kind: input, shape index: {}]
  %s2 = inlined_call_operand.hbm [shape: f32[3,4096], index: 2, kind: output, shape index: {}]
  %s3 = sld [smem:[#allocation0]]
  $region26: #{tpu_custom_call.1} parent=0
    _
  %s5 = ssub.s32 1, %s3
  %s6 = scalar_select 0, %s5, %s3
  $region1: #{tpu_custom_call.1} parent=0
    #allocation2 [shape = 'u8[16384]{0}', space=vmem, size = 0x4000, scoped, tag = 'input window, operand 0, single buffered']
    #allocation3 [shape = 's32[1]{0}', space=sflag, size = 0x4, scoped, tag = 'scoped memory for tpu_custom_call.1']
    #allocation4 [shape = 's32[1]{0}', space=sflag, size = 0x4, scoped, tag = 'scoped memory for tpu_custom_call.1']
    #allocation5 [shape = 'u8[65536]{0}', space=vmem, size = 0x10000, scoped, tag = 'input window, operand 1, single buffered']
    #allocation6 [shape = 's32[1]{0}', space=sflag, size = 0x4, scoped, tag = 'scoped memory for tpu_custom_call.1']
    #allocation7 [shape = 'u8[65536]{0}', space=vmem, size = 0x10000, scoped, tag = 'output window, operand 0, single buffered']
    %7 = vsyncpa [#allocation3], 0
    %8 = vsyncpa [#allocation6], 0
    %9 = vsyncpa [#allocation4], 0
    // Predicated region
    $region2: #{tpu_custom_call.1} parent=1 // pred_check
      _
    $region3: #{tpu_custom_call.1} parent=1 // pred_check_branch
      %11 = sbr.rel (0) target = $region5
    $region4: #{tpu_custom_call.1} parent=1 // pred_region
      %s13 = ssub.s32 512, 512
      %14 = vsyncadd [#allocation3], %s13
      %s16 = sshll.u32 [#allocation2], 4
      %s17 = int_to_ptr.vmem [resolvable:$true] %s16
      %19 = dma.hbm_to_vmem [thread:$0]  %s0, 512, %s17, [#allocation3]
    $region5: #{tpu_custom_call.1} parent=1 // pred_fallthru
      _
    // Predicated region
    $region6: #{tpu_custom_call.1} parent=1 // pred_check
      _
    $region7: #{tpu_custom_call.1} parent=1 // pred_check_branch
      %21 = sbr.rel (0) target = $region9
    $region8: #{tpu_custom_call.1} parent=1 // pred_region
      %s23 = ssub.s32 2048, 2048
      %24 = vsyncadd [#allocation6], %s23
      %s26 = sshll.u32 [#allocation5], 4
      %s27 = int_to_ptr.vmem [resolvable:$true] %s26
      %29 = dma.hbm_to_vmem [thread:$0]  %s1, 2048, %s27, [#allocation6]
    $region9: #{tpu_custom_call.1} parent=1 // pred_fallthru
      _
    // Predicated region
    $region10: #{tpu_custom_call.1} parent=1 // pred_check
      _
    $region11: #{tpu_custom_call.1} parent=1 // pred_check_branch
      %31 = sbr.rel (0) target = $region13
    $region12: #{tpu_custom_call.1} parent=1 // pred_region
      %32 = dma.done [#allocation3], 512
    $region13: #{tpu_custom_call.1} parent=1 // pred_fallthru
      _
    // Predicated region
    $region14: #{tpu_custom_call.1} parent=1 // pred_check
      _
    $region15: #{tpu_custom_call.1} parent=1 // pred_check_branch
      %34 = sbr.rel (0) target = $region17
    $region16: #{tpu_custom_call.1} parent=1 // pred_region
      %35 = dma.done [#allocation6], 2048
    $region17: #{tpu_custom_call.1} parent=1 // pred_fallthru
      _
    %v36 = vld [vmem:[#allocation2] sm:$0xff]
    %v37 = vld [vmem:[#allocation2 + $0x8] sm:$0xff]
    %v38 = vld [vmem:[#allocation2 + $0x10] sm:$0xff]
    %v39 = vld [vmem:[#allocation2 + $0x18] sm:$0xff]
    %v40 = vmul.f32 %v36, %v36
    %v41 = vmul.f32 %v37, %v37
    %v42 = vmul.f32 %v38, %v38
    %v43 = vmul.f32 %v39, %v39
    %v44 = vadd.f32 %v40, 1e-08
    %v45 = vadd.f32 %v41, 1e-08
    %v46 = vadd.f32 %v42, 1e-08
    %v47 = vadd.f32 %v43, 1e-08
    %v48 = vld [vmem:[#allocation5] sm:$0x77]
    %v49 = vld [vmem:[#allocation5 + $0x8] sm:$0x77]
    %v50 = vld [vmem:[#allocation5 + $0x10] sm:$0x77]
    %v51 = vld [vmem:[#allocation5 + $0x18] sm:$0x77]
    %v52 = vld [vmem:[#allocation5 + $0x20] sm:$0x77]
    %v53 = vld [vmem:[#allocation5 + $0x28] sm:$0x77]
    %v54 = vld [vmem:[#allocation5 + $0x30] sm:$0x77]
    %v55 = vld [vmem:[#allocation5 + $0x38] sm:$0x77]
    %v56 = vld [vmem:[#allocation5 + $0x40] sm:$0x77]
    %v57 = vld [vmem:[#allocation5 + $0x48] sm:$0x77]
    %v58 = vld [vmem:[#allocation5 + $0x50] sm:$0x77]
    %v59 = vld [vmem:[#allocation5 + $0x58] sm:$0x77]
    %v60 = vld [vmem:[#allocation5 + $0x60] sm:$0x77]
    %v61 = vld [vmem:[#allocation5 + $0x68] sm:$0x77]
    %v62 = vld [vmem:[#allocation5 + $0x70] sm:$0x77]
    %v63 = vld [vmem:[#allocation5 + $0x78] sm:$0x77]
    %v68 = vlaneseq
    %v69 = vshrl.u32 %v68, 7
    %v70 = vsub.s32 0, %v69
    %v71 = vrot.slane %v44, %v70
    %v72 = vlaneseq
    %v73 = vshrl.u32 %v72, 7
    %v74 = vsub.s32 1, %v73
    %v75 = vrot.slane %v44, %v74
    %v76 = vlaneseq
    %v77 = vshrl.u32 %v76, 7
    %v78 = vsub.s32 2, %v77
    %v79 = vrot.slane %v44, %v78
    %v80 = vlaneseq
    %v81 = vshrl.u32 %v80, 7
    %v82 = vsub.s32 3, %v81
    %v83 = vrot.slane %v44, %v82
    %v84 = vlaneseq
    %v85 = vshrl.u32 %v84, 7
    %v86 = vsub.s32 4, %v85
    %v87 = vrot.slane %v44, %v86
    %v88 = vlaneseq
    %v89 = vshrl.u32 %v88, 7
    %v90 = vsub.s32 5, %v89
    %v91 = vrot.slane %v44, %v90
    %v92 = vlaneseq
    %v93 = vshrl.u32 %v92, 7
    %v94 = vsub.s32 6, %v93
    %v95 = vrot.slane %v44, %v94
    %v96 = vlaneseq
    %v97 = vshrl.u32 %v96, 7
    %v98 = vsub.s32 7, %v97
    %v99 = vrot.slane %v44, %v98
    %v100 = vlaneseq
    %v101 = vshrl.u32 %v100, 7
    %v102 = vsub.s32 0, %v101
    %v103 = vrot.slane %v45, %v102
    %v104 = vlaneseq
    %v105 = vshrl.u32 %v104, 7
    %v106 = vsub.s32 1, %v105
    %v107 = vrot.slane %v45, %v106
    %v108 = vlaneseq
    %v109 = vshrl.u32 %v108, 7
    %v110 = vsub.s32 2, %v109
    %v111 = vrot.slane %v45, %v110
    %v112 = vlaneseq
    %v113 = vshrl.u32 %v112, 7
    %v114 = vsub.s32 3, %v113
    %v115 = vrot.slane %v45, %v114
    %v116 = vlaneseq
    %v117 = vshrl.u32 %v116, 7
    %v118 = vsub.s32 4, %v117
    %v119 = vrot.slane %v45, %v118
    %v120 = vlaneseq
    %v121 = vshrl.u32 %v120, 7
    %v122 = vsub.s32 5, %v121
    %v123 = vrot.slane %v45, %v122
    %v124 = vlaneseq
    %v125 = vshrl.u32 %v124, 7
    %v126 = vsub.s32 6, %v125
    %v127 = vrot.slane %v45, %v126
    %v128 = vlaneseq
    %v129 = vshrl.u32 %v128, 7
    %v130 = vsub.s32 7, %v129
    %v131 = vrot.slane %v45, %v130
    %v132 = vlaneseq
    %v133 = vshrl.u32 %v132, 7
    %v134 = vsub.s32 0, %v133
    %v135 = vrot.slane %v46, %v134
    %v136 = vlaneseq
    %v137 = vshrl.u32 %v136, 7
    %v138 = vsub.s32 1, %v137
    %v139 = vrot.slane %v46, %v138
    %v140 = vlaneseq
    %v141 = vshrl.u32 %v140, 7
    %v142 = vsub.s32 2, %v141
    %v143 = vrot.slane %v46, %v142
    %v144 = vlaneseq
    %v145 = vshrl.u32 %v144, 7
    %v146 = vsub.s32 3, %v145
    %v147 = vrot.slane %v46, %v146
    %v148 = vlaneseq
    %v149 = vshrl.u32 %v148, 7
    %v150 = vsub.s32 4, %v149
    %v151 = vrot.slane %v46, %v150
    %v152 = vlaneseq
    %v153 = vshrl.u32 %v152, 7
    %v154 = vsub.s32 5, %v153
    %v155 = vrot.slane %v46, %v154
    %v156 = vlaneseq
    %v157 = vshrl.u32 %v156, 7
    %v158 = vsub.s32 6, %v157
    %v159 = vrot.slane %v46, %v158
    %v160 = vlaneseq
    %v161 = vshrl.u32 %v160, 7
    %v162 = vsub.s32 7, %v161
    %v163 = vrot.slane %v46, %v162
    %v164 = vlaneseq
    %v165 = vshrl.u32 %v164, 7
    %v166 = vsub.s32 0, %v165
    %v167 = vrot.slane %v47, %v166
    %v168 = vlaneseq
    %v169 = vshrl.u32 %v168, 7
    %v170 = vsub.s32 1, %v169
    %v171 = vrot.slane %v47, %v170
    %v172 = vlaneseq
    %v173 = vshrl.u32 %v172, 7
    %v174 = vsub.s32 2, %v173
    %v175 = vrot.slane %v47, %v174
    %v176 = vlaneseq
    %v177 = vshrl.u32 %v176, 7
    %v178 = vsub.s32 3, %v177
    %v179 = vrot.slane %v47, %v178
    %v180 = vlaneseq
    %v181 = vshrl.u32 %v180, 7
    %v182 = vsub.s32 4, %v181
    %v183 = vrot.slane %v47, %v182
    %v184 = vlaneseq
    %v185 = vshrl.u32 %v184, 7
    %v186 = vsub.s32 5, %v185
    %v187 = vrot.slane %v47, %v186
    %v188 = vlaneseq
    %v189 = vshrl.u32 %v188, 7
    %v190 = vsub.s32 6, %v189
    %v191 = vrot.slane %v47, %v190
    %v192 = vlaneseq
    %v193 = vshrl.u32 %v192, 7
    %v194 = vsub.s32 7, %v193
    %v195 = vrot.slane %v47, %v194
    %v244 = vcombine.high %v48, %v48
    %v245 = vcombine.high %v49, %v49
    %v246 = vcombine.high %v50, %v50
    %v247 = vcombine.high %v51, %v51
    %v248 = vcombine.high %v52, %v52
    %v249 = vcombine.high %v53, %v53
    %v250 = vcombine.high %v54, %v54
    %v251 = vcombine.high %v55, %v55
    %v252 = vcombine.high %v56, %v56
    %v253 = vcombine.high %v57, %v57
    %v254 = vcombine.high %v58, %v58
    %v255 = vcombine.high %v59, %v59
    %v256 = vcombine.high %v60, %v60
    %v257 = vcombine.high %v61, %v61
    %v258 = vcombine.high %v62, %v62
    %v259 = vcombine.high %v63, %v63
    %v276 = vmul.f32 %v71, %v48
    %v277 = vmul.f32 %v75, %v244
    %v278 = vmul.f32 %v79, %v49
    %v279 = vmul.f32 %v83, %v245
    %v280 = vmul.f32 %v87, %v50
    %v281 = vmul.f32 %v91, %v246
    %v282 = vmul.f32 %v95, %v51
    %v283 = vmul.f32 %v99, %v247
    %v284 = vmul.f32 %v103, %v52
    %v285 = vmul.f32 %v107, %v248
    %v286 = vmul.f32 %v111, %v53
    %v287 = vmul.f32 %v115, %v249
    %v288 = vmul.f32 %v119, %v54
    %v289 = vmul.f32 %v123, %v250
    %v290 = vmul.f32 %v127, %v55
    %v291 = vmul.f32 %v131, %v251
    %v292 = vmul.f32 %v135, %v56
    %v293 = vmul.f32 %v139, %v252
    %v294 = vmul.f32 %v143, %v57
    %v295 = vmul.f32 %v147, %v253
    %v296 = vmul.f32 %v151, %v58
    %v297 = vmul.f32 %v155, %v254
    %v298 = vmul.f32 %v159, %v59
    %v299 = vmul.f32 %v163, %v255
    %v300 = vmul.f32 %v167, %v60
    %v301 = vmul.f32 %v171, %v256
    %v302 = vmul.f32 %v175, %v61
    %v303 = vmul.f32 %v179, %v257
    %v304 = vmul.f32 %v183, %v62
    %v305 = vmul.f32 %v187, %v258
    %v306 = vmul.f32 %v191, %v63
    %v307 = vmul.f32 %v195, %v259
    %v308 = vmul.f32 %v276, %v48
    %v309 = vmul.f32 %v277, %v244
    %v310 = vmul.f32 %v278, %v49
    %v311 = vmul.f32 %v279, %v245
    %v312 = vmul.f32 %v280, %v50
    %v313 = vmul.f32 %v281, %v246
    %v314 = vmul.f32 %v282, %v51
    %v315 = vmul.f32 %v283, %v247
    %v316 = vmul.f32 %v284, %v52
    %v317 = vmul.f32 %v285, %v248
    %v318 = vmul.f32 %v286, %v53
    %v319 = vmul.f32 %v287, %v249
    %v320 = vmul.f32 %v288, %v54
    %v321 = vmul.f32 %v289, %v250
    %v322 = vmul.f32 %v290, %v55
    %v323 = vmul.f32 %v291, %v251
    %v324 = vmul.f32 %v292, %v56
    %v325 = vmul.f32 %v293, %v252
    %v326 = vmul.f32 %v294, %v57
    %v327 = vmul.f32 %v295, %v253
    %v328 = vmul.f32 %v296, %v58
    %v329 = vmul.f32 %v297, %v254
    %v330 = vmul.f32 %v298, %v59
    %v331 = vmul.f32 %v299, %v255
    %v332 = vmul.f32 %v300, %v60
    %v333 = vmul.f32 %v301, %v256
    %v334 = vmul.f32 %v302, %v61
    %v335 = vmul.f32 %v303, %v257
    %v336 = vmul.f32 %v304, %v62
    %v337 = vmul.f32 %v305, %v258
    %v338 = vmul.f32 %v306, %v63
    %v339 = vmul.f32 %v307, %v259
    %v340 = vsub.f32 1.0, %v308
    %v341 = vsub.f32 1.0, %v309
    %v342 = vsub.f32 1.0, %v310
    %v343 = vsub.f32 1.0, %v311
    %v344 = vsub.f32 1.0, %v312
    %v345 = vsub.f32 1.0, %v313
    %v346 = vsub.f32 1.0, %v314
    %v347 = vsub.f32 1.0, %v315
    %v348 = vsub.f32 1.0, %v316
    %v349 = vsub.f32 1.0, %v317
    %v350 = vsub.f32 1.0, %v318
    %v351 = vsub.f32 1.0, %v319
    %v352 = vsub.f32 1.0, %v320
    %v353 = vsub.f32 1.0, %v321
    %v354 = vsub.f32 1.0, %v322
    %v355 = vsub.f32 1.0, %v323
    %v356 = vsub.f32 1.0, %v324
    %v357 = vsub.f32 1.0, %v325
    %v358 = vsub.f32 1.0, %v326
    %v359 = vsub.f32 1.0, %v327
    %v360 = vsub.f32 1.0, %v328
    %v361 = vsub.f32 1.0, %v329
    %v362 = vsub.f32 1.0, %v330
    %v363 = vsub.f32 1.0, %v331
    %v364 = vsub.f32 1.0, %v332
    %v365 = vsub.f32 1.0, %v333
    %v366 = vsub.f32 1.0, %v334
    %v367 = vsub.f32 1.0, %v335
    %v368 = vsub.f32 1.0, %v336
    %v369 = vsub.f32 1.0, %v337
    %v370 = vsub.f32 1.0, %v338
    %v371 = vsub.f32 1.0, %v339
    %v372 = vmul.f32 %v340, 0.01
    %v373 = vmul.f32 %v341, 0.01
    %v374 = vmul.f32 %v342, 0.01
    %v375 = vmul.f32 %v343, 0.01
    %v376 = vmul.f32 %v344, 0.01
    %v377 = vmul.f32 %v345, 0.01
    %v378 = vmul.f32 %v346, 0.01
    %v379 = vmul.f32 %v347, 0.01
    %v380 = vmul.f32 %v348, 0.01
    %v381 = vmul.f32 %v349, 0.01
    %v382 = vmul.f32 %v350, 0.01
    %v383 = vmul.f32 %v351, 0.01
    %v384 = vmul.f32 %v352, 0.01
    %v385 = vmul.f32 %v353, 0.01
    %v386 = vmul.f32 %v354, 0.01
    %v387 = vmul.f32 %v355, 0.01
    %v388 = vmul.f32 %v356, 0.01
    %v389 = vmul.f32 %v357, 0.01
    %v390 = vmul.f32 %v358, 0.01
    %v391 = vmul.f32 %v359, 0.01
    %v392 = vmul.f32 %v360, 0.01
    %v393 = vmul.f32 %v361, 0.01
    %v394 = vmul.f32 %v362, 0.01
    %v395 = vmul.f32 %v363, 0.01
    %v396 = vmul.f32 %v364, 0.01
    %v397 = vmul.f32 %v365, 0.01
    %v398 = vmul.f32 %v366, 0.01
    %v399 = vmul.f32 %v367, 0.01
    %v400 = vmul.f32 %v368, 0.01
    %v401 = vmul.f32 %v369, 0.01
    %v402 = vmul.f32 %v370, 0.01
    %v403 = vmul.f32 %v371, 0.01
    %v404 = vmax.f32 %v340, %v372
    %v405 = vmax.f32 %v341, %v373
    %v406 = vmax.f32 %v342, %v374
    %v407 = vmax.f32 %v343, %v375
    %v408 = vmax.f32 %v344, %v376
    %v409 = vmax.f32 %v345, %v377
    %v410 = vmax.f32 %v346, %v378
    %v411 = vmax.f32 %v347, %v379
    %v412 = vmax.f32 %v348, %v380
    %v413 = vmax.f32 %v349, %v381
    %v414 = vmax.f32 %v350, %v382
    %v415 = vmax.f32 %v351, %v383
    %v416 = vmax.f32 %v352, %v384
    %v417 = vmax.f32 %v353, %v385
    %v418 = vmax.f32 %v354, %v386
    %v419 = vmax.f32 %v355, %v387
    %v420 = vmax.f32 %v356, %v388
    %v421 = vmax.f32 %v357, %v389
    %v422 = vmax.f32 %v358, %v390
    %v423 = vmax.f32 %v359, %v391
    %v424 = vmax.f32 %v360, %v392
    %v425 = vmax.f32 %v361, %v393
    %v426 = vmax.f32 %v362, %v394
    %v427 = vmax.f32 %v363, %v395
    %v428 = vmax.f32 %v364, %v396
    %v429 = vmax.f32 %v365, %v397
    %v430 = vmax.f32 %v366, %v398
    %v431 = vmax.f32 %v367, %v399
    %v432 = vmax.f32 %v368, %v400
    %v433 = vmax.f32 %v369, %v401
    %v434 = vmax.f32 %v370, %v402
    %v435 = vmax.f32 %v371, %v403
    %v468 = vcombine.low %v404, %v405
    %v469 = vcombine.low %v406, %v407
    %v470 = vcombine.low %v408, %v409
    %v471 = vcombine.low %v410, %v411
    %v472 = vcombine.low %v412, %v413
    %v473 = vcombine.low %v414, %v415
    %v474 = vcombine.low %v416, %v417
    %v475 = vcombine.low %v418, %v419
    %v476 = vcombine.low %v420, %v421
    %v477 = vcombine.low %v422, %v423
    %v478 = vcombine.low %v424, %v425
    %v479 = vcombine.low %v426, %v427
    %v480 = vcombine.low %v428, %v429
    %v481 = vcombine.low %v430, %v431
    %v482 = vcombine.low %v432, %v433
    %v483 = vcombine.low %v434, %v435
    %500 = vst [vmem:[#allocation7] sm:$0x77] %v468
    %501 = vst [vmem:[#allocation7 + $0x8] sm:$0x77] %v469
    %502 = vst [vmem:[#allocation7 + $0x10] sm:$0x77] %v470
    %503 = vst [vmem:[#allocation7 + $0x18] sm:$0x77] %v471
    %504 = vst [vmem:[#allocation7 + $0x20] sm:$0x77] %v472
    %505 = vst [vmem:[#allocation7 + $0x28] sm:$0x77] %v473
    %506 = vst [vmem:[#allocation7 + $0x30] sm:$0x77] %v474
    %507 = vst [vmem:[#allocation7 + $0x38] sm:$0x77] %v475
    %508 = vst [vmem:[#allocation7 + $0x40] sm:$0x77] %v476
    %509 = vst [vmem:[#allocation7 + $0x48] sm:$0x77] %v477
    %510 = vst [vmem:[#allocation7 + $0x50] sm:$0x77] %v478
    %511 = vst [vmem:[#allocation7 + $0x58] sm:$0x77] %v479
    %512 = vst [vmem:[#allocation7 + $0x60] sm:$0x77] %v480
    %513 = vst [vmem:[#allocation7 + $0x68] sm:$0x77] %v481
    %514 = vst [vmem:[#allocation7 + $0x70] sm:$0x77] %v482
    %515 = vst [vmem:[#allocation7 + $0x78] sm:$0x77] %v483
    // Predicated region
    $region18: #{tpu_custom_call.1} parent=1 // pred_check
      _
    $region19: #{tpu_custom_call.1} parent=1 // pred_check_branch
      %517 = sbr.rel (0) target = $region21
    $region20: #{tpu_custom_call.1} parent=1 // pred_region
      %s519 = ssub.s32 2048, 2048
      %520 = vsyncadd [#allocation4], %s519
      %s522 = sshll.u32 [#allocation7], 4
      %s523 = int_to_ptr.vmem [resolvable:$true] %s522
      %525 = dma.vmem_to_hbm [thread:$0]  %s523, 2048, %s2, [#allocation4]
    $region21: #{tpu_custom_call.1} parent=1 // pred_fallthru
      _
    // Predicated region
    $region22: #{tpu_custom_call.1} parent=1 // pred_check
      _
    $region23: #{tpu_custom_call.1} parent=1 // pred_check_branch
      %527 = sbr.rel (0) target = $region25
    $region24: #{tpu_custom_call.1} parent=1 // pred_region
      %528 = dma.done [#allocation4], 2048
    $region25: #{tpu_custom_call.1} parent=1 // pred_fallthru
      _
    %529 = vsyncpa [#allocation3], 1
    %530 = vsyncpa [#allocation6], 1
    %531 = vsyncpa [#allocation4], 1

</llo_original>
